<compile_context>
chip_gen: v7x
topology: tpu7x:2x2x1
jax: 0.10.0
libtpu: 0.0.40
codegen_flags: <defaults>
</compile_context>

<pallas_src>
import math

import jax
import jax.numpy as jnp
from jax.experimental import pallas as pl
from jax.experimental.pallas import tpu as pltpu


# ------------------------------ planning ----------------------------------

_TB_MAX = 512      # batch-tile ceiling; also the nominal batch tile used when
                   # sizing tm/tk so the (Hp, Mp) plan is batch-independent
_TM_MAX = 2048     # map-tile ceiling
_TK_MAX = 4096     # reduction-tile ceiling


def _round_up(a, b):
    return (a + b - 1) // b * b


def _cdiv(a, b):
    return -(-a // b)


def _vmem_capacity_bytes():
    """Per-core VMEM (128 MiB v5e/v6e, 64 MiB v7x); conservative fallback."""
    try:
        cap = int(pltpu.get_tpu_info().vmem_capacity_bytes)
        if cap > 0:
            return cap
    except Exception:
        pass
    return 64 << 20


def _plan_hm(H, M, in_itemsize, out_itemsize, vmem_cap, tile_k_override=None):
    """Pick (fuse_k, tk, tm, Hp, Mp).

    Depends only on the layer dims (never the batch), so parameters that were
    pre-padded once at init stay valid for every forward call.
    """
    budget = int(vmem_cap * 0.70)          # leave headroom for compiler scratch

    def tile_bytes(tm, tk):
        # double-buffered x / weight / bias / out tiles + worst-case f32 acc
        return (2 * in_itemsize * (_TB_MAX * tk + tk * tm + tm)
                + 2 * out_itemsize * _TB_MAX * tm
                + 4 * _TB_MAX * tm)

    # ---- map (output) tile: lane-aligned, as few tiles as possible ---------
    Mp0 = _round_up(M, 128)
    m_align = 256 if Mp0 % 256 == 0 else 128    # 256-preference (v6e/v7x MXU)
    tk_probe = min(_round_up(H, 128), 512)
    tm = min(Mp0, _TM_MAX)
    while tm > m_align and tile_bytes(tm, tk_probe) > budget:
        tm -= m_align
    tm = max(tm, 128)
    if tm >= Mp0:
        tm, Mp = Mp0, Mp0
    else:
        n_m = _cdiv(Mp0, tm)
        tm = _round_up(_cdiv(Mp0, n_m), m_align)   # spread padding evenly
        Mp = tm * _cdiv(Mp0, tm)

    # ---- reduction: fuse the whole K dim when the weight panel fits VMEM ---
    if tile_k_override is None and H <= _TK_MAX and tile_bytes(tm, H) <= budget:
        return True, H, tm, H, Mp

    k_align = 256 if (H % 256 == 0 or H > 1024) else 128
    if tile_k_override is not None:
        tk = max(128, _round_up(min(int(tile_k_override), H), 128))
    else:
        tk = min(_round_up(H, k_align), _TK_MAX)
        while tk > k_align and tile_bytes(tm, tk) > budget:
            tk -= k_align
        tk = max(tk, 128)
        n_k = _cdiv(H, tk)
        tk = _round_up(_cdiv(H, n_k), k_align)     # spread padding evenly
    Hp = tk * _cdiv(H, tk)
    return False, tk, tm, Hp, Mp


def _plan_batch(B):
    if B <= _TB_MAX:
        tb = _round_up(max(B, 1), 8)
        return tb, tb
    n_b = _cdiv(B, _TB_MAX)
    tb = _round_up(_cdiv(B, n_b), 8)
    return tb, tb * _cdiv(B, tb)


# ------------------------------- kernels -----------------------------------

def _compact_kernel_fused(x_ref, w_ref, b_ref, o_ref):
    # Single-K-step fast path: x (tb,H) @ w (H,tm) + b (1,tm) -> relu.
    acc = jnp.dot(x_ref[...], w_ref[...], preferred_element_type=jnp.float32)
    acc = acc + b_ref[...].astype(jnp.float32)
    o_ref[...] = jnp.maximum(acc, 0.0).astype(o_ref.dtype)


def _compact_kernel_ktiled_f32(x_ref, w_ref, b_ref, o_ref):
    # Reduction path, f32 output: accumulate directly into the (k-invariant)
    # output block — no scratch, no extra acc->out copy.
    k = pl.program_id(2)

    @pl.when(k == 0)
    def _init():
        o_ref[...] = jnp.zeros_like(o_ref)

    o_ref[...] += jnp.dot(x_ref[...], w_ref[...],
                          preferred_element_type=jnp.float32)

    @pl.when(k == pl.num_programs(2) - 1)
    def _finalize():
        o_ref[...] = jnp.maximum(o_ref[...] + b_ref[...].astype(jnp.float32),
                                 0.0)


def _compact_kernel_ktiled_acc(x_ref, w_ref, b_ref, o_ref, acc_ref):
    # Reduction path, low-precision output: keep a resident f32 accumulator.
    k = pl.program_id(2)

    @pl.when(k == 0)
    def _init():
        acc_ref[...] = jnp.zeros_like(acc_ref)

    acc_ref[...] += jnp.dot(x_ref[...], w_ref[...],
                            preferred_element_type=jnp.float32)

    @pl.when(k == pl.num_programs(2) - 1)
    def _finalize():
        out = acc_ref[...] + b_ref[...].astype(jnp.float32)
        o_ref[...] = jnp.maximum(out, 0.0).astype(o_ref.dtype)


# ------------------------------- wrapper ------------------------------------

def compact_layer_forward(x, weight_t, bias, *, map_size=None,
                          cast_to_bf16=False, tile_k_override=None):
    """relu(x @ weight_t + bias) — CompactLayer.forward at eval time
    (Dropout(p=0.3) is the identity in eval mode).

    x:        (B, H)
    weight_t: (H, M)  — transpose of torch nn.Linear.weight (may be pre-padded
                        with pad_compact_layer_params; pass map_size then)
    bias:     (M,)
    map_size: logical number of output columns (defaults to weight_t.shape[1])
    cast_to_bf16: run the MXU in bf16 (f32 accumulation) — less MXU time and
                  half the DMA bytes, at bf16 input precision.
    """
    B, H = x.shape
    Hw, Mw = weight_t.shape
    assert Hw == H, "weight_t must have shape (hidden_size, map_size)"
    assert bias.shape == (Mw,)
    M_out = Mw if map_size is None else int(map_size)
    assert 0 < M_out <= Mw

    out_dtype = x.dtype
    out_is_f32 = out_dtype == jnp.float32
    compute_dtype = jnp.bfloat16 if cast_to_bf16 else x.dtype
    in_itemsize = jnp.dtype(compute_dtype).itemsize
    out_itemsize = jnp.dtype(out_dtype).itemsize

    vmem_cap = _vmem_capacity_bytes()
    fuse_k, tk, tm, Hp, Mp = _plan_hm(H, Mw, in_itemsize, out_itemsize,
                                      vmem_cap, tile_k_override)
    tb, Bp = _plan_batch(B)

    # Megacore (v7x has 2 TensorCores): guarantee >= 2 blocks along a
    # "parallel" grid axis whenever the problem allows it.
    if (Mp // tm) * (Bp // tb) == 1:
        if tm % 256 == 0 and tm >= 256:
            tm //= 2
        elif tb % 16 == 0 and tb >= 16:
            tb //= 2

    if cast_to_bf16:
        x = x.astype(jnp.bfloat16)
        weight_t = weight_t.astype(jnp.bfloat16)

    # Zero-padding.  x is padded per call; weight/bias only when not already
    # aligned (use pad_compact_layer_params once at init to avoid that).
    if (Bp, Hp) != (B, H):
        x = jnp.pad(x, ((0, Bp - B), (0, Hp - H)))
    if (Hp, Mp) != (H, Mw):
        weight_t = jnp.pad(weight_t, ((0, Hp - H), (0, Mp - Mw)))
    bias2d = bias.reshape(1, Mw)
    if Mp != Mw:
        bias2d = jnp.pad(bias2d, ((0, 0), (0, Mp - Mw)))

    # Explicit scoped-VMEM limit (v5e defaults to 16 MiB, v6e/v7x to 32 MiB),
    # capped at 90% of the physical per-core VMEM (64 MiB on v7x).
    if fuse_k:
        need = (2 * in_itemsize * (tb * Hp + Hp * tm + tm)
                + 2 * out_itemsize * tb * tm)
    else:
        need = (2 * in_itemsize * (tb * tk + tk * tm + tm)
                + 2 * out_itemsize * tb * tm
                + (0 if out_is_f32 else 4 * tb * tm))
    vmem_limit = int(min(max(2 * need, 32 << 20), int(vmem_cap * 0.9)))

    if fuse_k:
        # Fast path: no K axis, no accumulator.  Grid is (map, batch) with
        # batch innermost so the weight panel block index is constant across
        # batch tiles -> the weight is DMA'd from HBM once per map tile.
        grid = (Mp // tm, Bp // tb)
        out = pl.pallas_call(
            _compact_kernel_fused,
            out_shape=jax.ShapeDtypeStruct((Bp, Mp), out_dtype),
            grid_spec=pltpu.PrefetchScalarGridSpec(
                num_scalar_prefetch=0,
                grid=grid,
                in_specs=[
                    pl.BlockSpec((tb, Hp), lambda j, i: (i, 0)),   # x tile
                    pl.BlockSpec((Hp, tm), lambda j, i: (0, j)),   # weight
                    pl.BlockSpec((1, tm), lambda j, i: (0, j)),    # bias
                ],
                out_specs=pl.BlockSpec((tb, tm), lambda j, i: (i, j)),
            ),
            compiler_params=pltpu.CompilerParams(
                dimension_semantics=("parallel", "parallel"),
                vmem_limit_bytes=vmem_limit),
        )(x, weight_t, bias2d)
    else:
        # Large-H path: K axis last; accumulate into the resident output block
        # for f32 outputs, into an f32 scratch otherwise.
        grid = (Bp // tb, Mp // tm, Hp // tk)
        kernel = (_compact_kernel_ktiled_f32 if out_is_f32
                  else _compact_kernel_ktiled_acc)
        scratch = () if out_is_f32 else (pltpu.VMEM((tb, tm), jnp.float32),)
        out = pl.pallas_call(
            kernel,
            out_shape=jax.ShapeDtypeStruct((Bp, Mp), out_dtype),
            grid_spec=pltpu.PrefetchScalarGridSpec(
                num_scalar_prefetch=0,
                grid=grid,
                in_specs=[
                    pl.BlockSpec((tb, tk), lambda i, j, k: (i, k)),   # x
                    pl.BlockSpec((tk, tm), lambda i, j, k: (k, j)),   # weight
                    pl.BlockSpec((1, tm), lambda i, j, k: (0, j)),    # bias
                ],
                out_specs=pl.BlockSpec((tb, tm), lambda i, j, k: (i, j)),
                scratch_shapes=scratch,
            ),
            compiler_params=pltpu.CompilerParams(
                dimension_semantics=("parallel", "parallel", "arbitrary"),
                vmem_limit_bytes=vmem_limit),
        )(x, weight_t, bias2d)

    if Bp != B or Mp != M_out:
        out = out[:B, :M_out]
    return out


# ------------------------------ parameters ----------------------------------

def pad_compact_layer_params(weight_t, bias):
    """Pre-pad the map dimension to the lane width (128) once at init so the
    per-call forward never reads/writes the whole weight just to pad it.
    Returns (weight_t_padded, bias_padded, logical_map_size)."""
    H, M = weight_t.shape
    Mp = _round_up(M, 128)
    if Mp != M:
        weight_t = jnp.pad(weight_t, ((0, 0), (0, Mp - M)))
        bias = jnp.pad(bias, ((0, Mp - M),))
    return weight_t, bias, M


def init_compact_layer_params(key, hidden_size, map_size):
    """Deterministic init matching CompactLayer.reset_parameters():
    kaiming_uniform_(weight, a=sqrt(5)) -> bound = 1/sqrt(fan_in);
    uniform_(bias, -1/sqrt(fan_in), 1/sqrt(fan_in))."""
    kw, kb = jax.random.split(key)
    bound = 1.0 / math.sqrt(hidden_size)
    # torch stores weight as (map_size, hidden_size); kernel uses the
    # transposed (hidden_size, map_size) layout.
    weight_t = jax.random.uniform(
        kw, (hidden_size, map_size), jnp.float32, -bound, bound)
    bias = jax.random.uniform(kb, (map_size,), jnp.float32, -bound, bound)
    return weight_t, bias


# --------------------------------- demo --------------------------------------

if __name__ == "__main__":
    key = jax.random.PRNGKey(0)
    ks = jax.random.split(key, 8)

    def ref_forward(x, w, b):
        y = jax.lax.dot(x, w, precision=jax.lax.Precision.HIGHEST)
        return jnp.maximum(y + b, 0.0)

    # 1) aligned toy sizes -> fused fast path, no padding
    B, H, M = 8, 32, 128
    x1 = jax.random.normal(ks[0], (B, H), jnp.float32)
    w1, b1 = init_compact_layer_params(ks[1], H, M)
    o1 = jax.block_until_ready(compact_layer_forward(x1, w1, b1))
    assert o1.shape == (B, M)
    assert jnp.allclose(o1, ref_forward(x1, w1, b1), atol=1e-5, rtol=1e-5)

    # 2) ragged sizes -> batch / map padding paths
    B, H, M = 5, 32, 96
    x2 = jax.random.normal(ks[2], (B, H), jnp.float32)
    w2, b2 = init_compact_layer_params(ks[3], H, M)
    o2 = jax.block_until_ready(compact_layer_forward(x2, w2, b2))
    assert o2.shape == (B, M)
    assert jnp.allclose(o2, ref_forward(x2, w2, b2), atol=1e-5, rtol=1e-5)

    # 3) multi-block grid (>= 2 parallel blocks for megacore) + pre-padded params
    B, H, M = 160, 256, 384
    x3 = jax.random.normal(ks[4], (B, H), jnp.float32)
    w3, b3 = init_compact_layer_params(ks[5], H, M)
    w3p, b3p, m3 = pad_compact_layer_params(w3, b3)
    o3 = jax.block_until_ready(
        compact_layer_forward(x3, w3p, b3p, map_size=m3))
    assert o3.shape == (B, M)
    assert jnp.allclose(o3, ref_forward(x3, w3, b3), atol=1e-4, rtol=1e-4)

    # 4) forced K tiling -> exercises the reduction kernel (accumulate in o_ref)
    B, H, M = 32, 512, 256
    x4 = jax.random.normal(ks[6], (B, H), jnp.float32)
    w4, b4 = init_compact_layer_params(ks[7], H, M)
    o4 = jax.block_until_ready(
        compact_layer_forward(x4, w4, b4, tile_k_override=128))
    assert o4.shape == (B, M)
    assert jnp.allclose(o4, ref_forward(x4, w4, b4), atol=1e-4, rtol=1e-4)

    # 5) optional bf16 MXU path (f32 accumulation)
    o5 = jax.block_until_ready(
        compact_layer_forward(x1, w1, b1, cast_to_bf16=True))
    assert jnp.allclose(o5, ref_forward(x1, w1, b1), atol=5e-2, rtol=5e-2)

    # TODO(synk): training-mode Dropout(p=0.3) would need pltpu.prng_seed +
    # pltpu.stateful_bernoulli; eval-mode forward (identity dropout) only here.
    print("KERNEL_OK")
</pallas_src>

<mosaic_0001>
module attributes {stable_mosaic.version = 11 : i64} {
  func.func @_compact_kernel_fused(%arg0: i32, %arg1: i32, %arg2: memref<8x32xf32, #tpu.memory_space<vmem>>, %arg3: memref<32x128xf32, #tpu.memory_space<vmem>>, %arg4: memref<1x128xf32, #tpu.memory_space<vmem>>, %arg5: memref<8x128xf32, #tpu.memory_space<vmem>>) attributes {dimension_semantics = [#tpu.dimension_semantics<parallel>, #tpu.dimension_semantics<parallel>], iteration_bounds = array<i64: 1, 1>, scalar_prefetch = 0 : i64, scratch_operands = 0 : i64, tpu.core_type = #tpu.core_type<tc>, window_params = [{transform_indices = @transform_0, window_bounds = array<i64: 8, 32>}, {transform_indices = @transform_1, window_bounds = array<i64: 32, 128>}, {transform_indices = @transform_2, window_bounds = array<i64: 1, 128>}, {transform_indices = @transform_3, window_bounds = array<i64: 8, 128>}]} {
    %c0 = arith.constant 0 : index
    %c0_0 = arith.constant 0 : index
    %0 = vector.load %arg2[%c0, %c0_0] : memref<8x32xf32, #tpu.memory_space<vmem>>, vector<8x32xf32>
    %c0_1 = arith.constant 0 : index
    %c0_2 = arith.constant 0 : index
    %1 = vector.load %arg3[%c0_1, %c0_2] : memref<32x128xf32, #tpu.memory_space<vmem>>, vector<32x128xf32>
    %cst = arith.constant dense<0.000000e+00> : vector<8x128xf32>
    %2 = tpu.matmul %0, %1, %cst {dimension_numbers = #tpu.dot_dimension_numbers<[1], [0], [0], [1], [0, 0, 1, 1], [], []>} : vector<8x32xf32>, vector<32x128xf32>, vector<8x128xf32> -> vector<8x128xf32>
    %c0_3 = arith.constant 0 : index
    %c0_4 = arith.constant 0 : index
    %3 = vector.load %arg4[%c0_3, %c0_4] : memref<1x128xf32, #tpu.memory_space<vmem>>, vector<1x128xf32>
    %4 = vector.broadcast %3 : vector<1x128xf32> to vector<8x128xf32>
    %5 = arith.addf %2, %4 : vector<8x128xf32>
    %cst_5 = arith.constant 0.000000e+00 : f32
    %6 = vector.broadcast %cst_5 : f32 to vector<8x128xf32>
    %7 = arith.maximumf %5, %6 : vector<8x128xf32>
    %c0_6 = arith.constant 0 : index
    %c0_7 = arith.constant 0 : index
    %8 = vector.load %arg5[%c0_6, %c0_7] : memref<8x128xf32, #tpu.memory_space<vmem>>, vector<8x128xf32>
    tpu.vector_store %arg5[%c0_6, %c0_7], %7 {strides = array<i32>} : memref<8x128xf32, #tpu.memory_space<vmem>>, vector<8x128xf32>,
    return
  }
  func.func @transform_0(%arg0: i32, %arg1: i32) -> (i32, i32) {
    %c0_i32 = arith.constant 0 : i32
    %c0_i32_0 = arith.constant 0 : i32
    return %arg1, %c0_i32 : i32, i32
  }
  func.func @transform_1(%arg0: i32, %arg1: i32) -> (i32, i32) {
    %c0_i32 = arith.constant 0 : i32
    %c0_i32_0 = arith.constant 0 : i32
    return %c0_i32, %arg0 : i32, i32
  }
  func.func @transform_2(%arg0: i32, %arg1: i32) -> (i32, i32) {
    %c0_i32 = arith.constant 0 : i32
    %c0_i32_0 = arith.constant 0 : i32
    return %c0_i32, %arg0 : i32, i32
  }
  func.func @transform_3(%arg0: i32, %arg1: i32) -> (i32, i32) {
    %c0_i32 = arith.constant 0 : i32
    return %arg1, %arg0 : i32, i32
  }
}

</mosaic_0001>

<llo_original>
// kernel: tpu_custom_call.1
$region0: #{tpu_custom_call.1}
  #allocation0 [shape = 'u32[]', space=smem, size = 0x4, offset = 0x4, fixed_abs, tag = 'smem constant byte address 0x4 - core index']
  #allocation1 [shape = 'u32[144,128]{1,0:T(1,128)}', space=vmem, size = 0x12000, scoped, tag = 'internal scratch']
  %s0 = inlined_call_operand.hbm [shape: f32[8,32], index: 0, kind: input, shape index: {}]
  %s1 = inlined_call_operand.hbm [shape: f32[32,128], index: 1, kind: input, shape index: {}]
  %s2 = inlined_call_operand.vmem [shape: f32[1,128], index: 2, kind: input, shape index: {}]
  %s3 = inlined_call_operand.hbm [shape: f32[8,128], index: 3, kind: output, shape index: {}]
  %s4 = sld [smem:[#allocation0]]
  $region30: #{tpu_custom_call.1} parent=0
    _
  %s6 = ssub.s32 1, %s4
  %s7 = scalar_select 0, %s6, %s4
  $region1: #{tpu_custom_call.1} parent=0
    #allocation2 [shape = 'u8[4096]{0}', space=vmem, size = 0x1000, scoped, tag = 'input window, operand 0, single buffered']
    #allocation3 [shape = 's32[1]{0}', space=sflag, size = 0x4, scoped, tag = 'scoped memory for tpu_custom_call.1']
    #allocation4 [shape = 's32[1]{0}', space=sflag, size = 0x4, scoped, tag = 'scoped memory for tpu_custom_call.1']
    #allocation5 [shape = 'u8[16384]{0}', space=vmem, size = 0x4000, scoped, tag = 'input window, operand 1, single buffered']
    #allocation6 [shape = 's32[1]{0}', space=sflag, size = 0x4, scoped, tag = 'scoped memory for tpu_custom_call.1']
    #allocation7 [shape = 'u8[4096]{0}', space=vmem, size = 0x1000, scoped, tag = 'output window, operand 0, single buffered']
    %8 = vsyncpa [#allocation3], 0
    %9 = vsyncpa [#allocation6], 0
    %10 = vsyncpa [#allocation4], 0
    // Predicated region
    $region2: #{tpu_custom_call.1} parent=1 // pred_check
      _
    $region3: #{tpu_custom_call.1} parent=1 // pred_check_branch
      %12 = sbr.rel (0) target = $region5
    $region4: #{tpu_custom_call.1} parent=1 // pred_region
      %s14 = ssub.s32 128, 128
      %15 = vsyncadd [#allocation3], %s14
      %s17 = sshll.u32 [#allocation2], 4
      %s18 = int_to_ptr.vmem [resolvable:$true] %s17
      %20 = dma.hbm_to_vmem [thread:$0]  %s0, 128, %s18, [#allocation3]
    $region5: #{tpu_custom_call.1} parent=1 // pred_fallthru
      _
    // Predicated region
    $region6: #{tpu_custom_call.1} parent=1 // pred_check
      _
    $region7: #{tpu_custom_call.1} parent=1 // pred_check_branch
      %22 = sbr.rel (0) target = $region9
    $region8: #{tpu_custom_call.1} parent=1 // pred_region
      %s24 = ssub.s32 512, 512
      %25 = vsyncadd [#allocation6], %s24
      %s26 = sshll.u32 [#allocation5], 4
      %s27 = int_to_ptr.vmem [resolvable:$true] %s26
      %32 = dma.hbm_to_vmem [thread:$0]  %s1, 512, %s27, [#allocation6], 128, 128, 8
    $region9: #{tpu_custom_call.1} parent=1 // pred_fallthru
      _
    // Predicated region
    $region10: #{tpu_custom_call.1} parent=1 // pred_check
      _
    $region11: #{tpu_custom_call.1} parent=1 // pred_check_branch
      %34 = sbr.rel (0) target = $region13
    $region12: #{tpu_custom_call.1} parent=1 // pred_region
      _
    $region13: #{tpu_custom_call.1} parent=1 // pred_fallthru
      _
    // Predicated region
    $region14: #{tpu_custom_call.1} parent=1 // pred_check
      _
    $region15: #{tpu_custom_call.1} parent=1 // pred_check_branch
      %36 = sbr.rel (0) target = $region17
    $region16: #{tpu_custom_call.1} parent=1 // pred_region
      %37 = dma.done [#allocation3], 128
    $region17: #{tpu_custom_call.1} parent=1 // pred_fallthru
      _
    // Predicated region
    $region18: #{tpu_custom_call.1} parent=1 // pred_check
      _
    $region19: #{tpu_custom_call.1} parent=1 // pred_check_branch
      %39 = sbr.rel (0) target = $region21
    $region20: #{tpu_custom_call.1} parent=1 // pred_region
      %40 = dma.done [#allocation6], 512
    $region21: #{tpu_custom_call.1} parent=1 // pred_fallthru
      _
    %v41 = vld [vmem:[#allocation2] sm:$0xff]
    %v42 = vld [vmem:[#allocation5] sm:$0xff]
    %v43 = vld [vmem:[#allocation5 + $0x8] sm:$0xff]
    %v44 = vld [vmem:[#allocation5 + $0x10] sm:$0xff]
    %v45 = vld [vmem:[#allocation5 + $0x18] sm:$0xff]
    %v46 = vld [vmem:[%s2] sm:$0x1]
    %v48 = vlaneseq
    %v49 = vshrl.u32 %v48, 7
    %v50 = vsub.s32 0, %v49
    %v51 = vrot.slane %v46, %v50
    %vm53 = vcmask 261120
    %v55 = vsel %vm53, %v41, 0
    %57 = vmatprep.subr.mxu0 0.0
    %58 = vmatpush1.msra.mxu0 %v42
    %59 = vmatprep.subr.mxu0 0.0
    %60 = vmatpush1.msra.mxu0 %v43
    %61 = vmatprep.subr.mxu0 0.0
    %62 = vmatpush1.msra.mxu0 %v44
    %63 = vmatprep.subr.mxu0 0.0
    %64 = vmatpush1.msra.mxu0 %v45
    %65 = vmatprep.subr.mxu0 0.0
    %66 = vmatpush1.msra.mxu0 0.0
    %67 = vmatprep.subr.mxu0 0.0
    %68 = vmatpush1.msra.mxu0 0.0
    %69 = vmatprep.subr.mxu0 0.0
    %70 = vmatpush1.msra.mxu0 0.0
    %71 = vmatprep.subr.mxu0 0.0
    %72 = vmatpush1.msra.mxu0 0.0
    %73 = vmatprep.subr.mxu0 0.0
    %74 = vmatpush1.msra.mxu0 0.0
    %75 = vmatprep.subr.mxu0 0.0
    %76 = vmatpush1.msra.mxu0 0.0
    %77 = vmatprep.subr.mxu0 0.0
    %78 = vmatpush1.msra.mxu0 0.0
    %79 = vmatprep.subr.mxu0 0.0
    %80 = vmatpush1.msra.mxu0 0.0
    %81 = vmatprep.subr.mxu0 0.0
    %82 = vmatpush1.msra.mxu0 0.0
    %83 = vmatprep.subr.mxu0 0.0
    %84 = vmatpush1.msra.mxu0 0.0
    %85 = vmatprep.subr.mxu0 0.0
    %86 = vmatpush1.msra.mxu0 0.0
    %87 = vmatprep.subr.mxu0 0.0
    %88 = vmatpush1.msra.mxu0 0.0
    %89 = vmatprep.subr.mxu0 0.0
    %90 = vmatpush1.msra.mxu0 0.0
    %91 = vmatprep.subr.mxu0 0.0
    %92 = vmatpush1.msra.mxu0 0.0
    %93 = vmatprep.subr.mxu0 0.0
    %94 = vmatpush1.msra.mxu0 0.0
    %95 = vmatprep.subr.mxu0 0.0
    %96 = vmatpush1.msra.mxu0 0.0
    %97 = vmatprep.subr.mxu0 0.0
    %98 = vmatpush1.msra.mxu0 0.0
    %99 = vmatprep.subr.mxu0 0.0
    %100 = vmatpush1.msra.mxu0 0.0
    %101 = vmatprep.subr.mxu0 0.0
    %102 = vmatpush1.msra.mxu0 0.0
    %103 = vmatprep.subr.mxu0 0.0
    %104 = vmatpush1.msra.mxu0 0.0
    %105 = vmatprep.subr.mxu0 0.0
    %106 = vmatpush1.msra.mxu0 0.0
    %107 = vmatprep.subr.mxu0 0.0
    %108 = vmatpush1.msra.mxu0 0.0
    %109 = vmatprep.subr.mxu0 0.0
    %110 = vmatpush1.msra.mxu0 0.0
    %111 = vmatprep.subr.mxu0 0.0
    %112 = vmatpush1.msra.mxu0 0.0
    %113 = vmatprep.subr.mxu0 0.0
    %114 = vmatpush1.msra.mxu0 0.0
    %115 = vmatprep.subr.mxu0 0.0
    %116 = vmatpush1.msra.mxu0 0.0
    %117 = vmatprep.subr.mxu0 0.0
    %118 = vmatpush1.msra.mxu0 0.0
    %119 = vmatprep.subr.mxu0 0.0
    %120 = vmatpush1.msra.mxu0 0.0
    %121 = vmatprep.mubr.f32.mxu0 0.0
    %122 = vmatmul.mubr.f32.gmra.mrb[0].mxu0 %v55
    %v123 = vpop.f32.mrb[0].mxu0
    %v124 = vadd.f32 %v51, %v123
    %v125 = vpop.f32.mrb[0].mxu0
    %126 = vdwg.mxu0
    %v127 = vmax.f32 %v124, 0.0
    %128 = vst [vmem:[#allocation7] sm:$0xff] %v127
    // Predicated region
    $region22: #{tpu_custom_call.1} parent=1 // pred_check
      _
    $region23: #{tpu_custom_call.1} parent=1 // pred_check_branch
      %130 = sbr.rel (0) target = $region25
    $region24: #{tpu_custom_call.1} parent=1 // pred_region
      %s132 = ssub.s32 128, 128
      %133 = vsyncadd [#allocation4], %s132
      %s135 = sshll.u32 [#allocation7], 4
      %s136 = int_to_ptr.vmem [resolvable:$true] %s135
      %138 = dma.vmem_to_hbm [thread:$0]  %s136, 128, %s3, [#allocation4]
    $region25: #{tpu_custom_call.1} parent=1 // pred_fallthru
      _
    // Predicated region
    $region26: #{tpu_custom_call.1} parent=1 // pred_check
      _
    $region27: #{tpu_custom_call.1} parent=1 // pred_check_branch
      %140 = sbr.rel (0) target = $region29
    $region28: #{tpu_custom_call.1} parent=1 // pred_region
      %141 = dma.done [#allocation4], 128
    $region29: #{tpu_custom_call.1} parent=1 // pred_fallthru
      _
    %142 = vsyncpa [#allocation3], 1
    %143 = vsyncpa [#allocation6], 1
    %144 = vsyncpa [#allocation4], 1

</llo_original>
